<compile_context>
chip_gen: v6e
topology: v6e:2x2x1
jax: 0.10.0
libtpu: 0.0.40
codegen_flags: <defaults>
</compile_context>

<pallas_src>
import functools
import numpy as np
import jax
import jax.numpy as jnp
from jax.experimental import pallas as pl
from jax.experimental.pallas import tpu as pltpu


def _round_up(v, m):
    return ((v + m - 1) // m) * m


# ----------------------------------------------------------------------------
# Pallas kernel: one grid step per batch image, layout (channels, H*W) with the
# flattened spatial dim on the lane axis.
# ----------------------------------------------------------------------------
def _inception_kernel(H, W, Cin, GROUP, TAIL,
                      x_ref, wfin_ref, bfin_ref, out_ref):
    HW = H * W
    f32 = jnp.float32
    x = x_ref[0]                                             # (Cin, HW)

    # ---- hoisted lane-index arithmetic (single iota / col / boundary masks) ----
    idx = jax.lax.broadcasted_iota(jnp.int32, (Cin, HW), 1)
    if W & (W - 1) == 0:
        col = idx & (W - 1)
    else:
        col = jnp.remainder(idx, W)      # exact integer modulo for non power-of-two W
    row_ge1 = idx >= W                   # h >= 1
    row_le_last = idx < HW - W           # h <= H-2
    col_ge1 = col >= 1
    col_le_last = col <= W - 2

    def take(a, d):
        """out[..., j] = a[..., (j + d) % n] along the lane axis."""
        n = a.shape[-1]
        d = d % n
        if d == 0:
            return a
        return pltpu.roll(a, n - d, axis=a.ndim - 1)

    # ---- 5 column-shifted copies of x (dw = -2..+2), circular in w ----
    cs = [
        jnp.where(col <= 1,     take(x, W - 2), take(x, -2)),   # dw = -2
        jnp.where(col == 0,     take(x, W - 1), take(x, -1)),   # dw = -1
        x,                                                      # dw =  0
        jnp.where(col == W - 1, take(x, 1 - W), take(x, 1)),    # dw = +1
        jnp.where(col >= W - 2, take(x, 2 - W), take(x, 2)),    # dw = +2
    ]

    # ---- stack into one 8-sublane-aligned base; one roll of the stack per dh ----
    pad = GROUP - 5 * Cin
    blocks = cs + ([jnp.zeros((pad, HW), f32)] if pad else [])
    base = jnp.concatenate(blocks, axis=0)                      # (GROUP, HW)
    groups = [take(base, dh * W) for dh in (-2, -1, 0, 1, 2)]   # 4 XLU rolls (dh=0 free)

    # ---- 3x3 / stride-1 max pool (implicit -inf padding), reusing central taps ----
    neg = f32(-jnp.inf)
    pooled = x                                                  # (dh, dw) = (0, 0) tap
    for dh in (-1, 0, 1):
        g = groups[dh + 2]
        for dw in (-1, 0, 1):
            if dh == 0 and dw == 0:
                continue
            tap = g[(dw + 2) * Cin:(dw + 3) * Cin]              # circular tap(dh, dw)
            valid = None
            if dh == -1:
                valid = row_ge1
            elif dh == 1:
                valid = row_le_last
            if dw == -1:
                valid = col_ge1 if valid is None else jnp.logical_and(valid, col_ge1)
            elif dw == 1:
                valid = col_le_last if valid is None else jnp.logical_and(valid, col_le_last)
            pooled = jnp.maximum(pooled, jnp.where(valid, tap, neg))

    # ---- one fused matmul producing all four branches, already concatenated ----
    tail_pad = TAIL - Cin
    tail = [pooled] + ([jnp.zeros((tail_pad, HW), f32)] if tail_pad else [])
    feat = jnp.concatenate(groups + tail, axis=0)               # (K, HW)
    out = jnp.dot(wfin_ref[...], feat.astype(wfin_ref.dtype),
                  preferred_element_type=jnp.float32) + bfin_ref[...]
    out_ref[0] = out.astype(out_ref.dtype)


# ----------------------------------------------------------------------------
# Host-side weight composition + packing into one fused (4*O, K) matrix
# ----------------------------------------------------------------------------
def _compose_and_pack(params, Cin, O, GROUP, TAIL, w_dtype=jnp.bfloat16):
    f32 = jnp.float32
    W1, b1 = [p.astype(f32) for p in params['b1c1']]   # (O, Cin, 1, 1), (O,)
    W2, b2 = [p.astype(f32) for p in params['b1c2']]   # (O, O, 3, 3)
    W3, b3 = [p.astype(f32) for p in params['b1c3']]
    V1, c1 = [p.astype(f32) for p in params['b2c1']]
    V2, c2 = [p.astype(f32) for p in params['b2c2']]
    U,  u  = [p.astype(f32) for p in params['b3c1']]
    T,  t  = [p.astype(f32) for p in params['b4c1']]

    # branch1: 1x1 -> circular 3x3 -> circular 3x3  ==  one circular 5x5 on x.
    w2p = jnp.einsum('oahw,ac->ochw', W2, W1[:, :, 0, 0])        # (O, Cin, 3, 3)
    b2p = b2 + jnp.einsum('oahw,a->o', W2, b1)
    w5 = jnp.zeros((O, Cin, 5, 5), f32)
    for kh in range(3):
        for kw in range(3):
            w5 = w5.at[:, :, kh:kh + 3, kw:kw + 3].add(
                jnp.einsum('oa,achw->ochw', W3[:, :, kh, kw], w2p))
    b5 = b3 + jnp.einsum('oahw,a->o', W3, b2p)

    # branch2: 1x1 -> circular 3x3  ==  one circular 3x3 on x.
    v3 = jnp.einsum('oahw,ac->ochw', V2, V1[:, :, 0, 0])         # (O, Cin, 3, 3)
    c3 = c2 + jnp.einsum('oahw,a->o', V2, c1)

    Ctot = 4 * O
    K = 5 * GROUP + TAIL
    wfin = jnp.zeros((Ctot, K), f32)

    # Column layout of feat: for each dh block (GROUP cols): 5 dw sub-blocks of Cin
    # (kh*5+kw order flattened as (dh, dw, ci)) + zero pad; then pooled x (+ pad).
    w5_im = jnp.transpose(w5, (0, 2, 3, 1))                      # (O, kh, kw, Cin)
    for kh in range(5):
        wfin = wfin.at[0:O, kh * GROUP: kh * GROUP + 5 * Cin].set(
            w5_im[:, kh].reshape(O, 5 * Cin))
    v_im = jnp.transpose(v3, (0, 2, 3, 1))                       # (O, kh, kw, Cin)
    for kh in range(3):
        g = (kh + 1) * GROUP                                     # dh = kh - 1 -> block kh+1
        wfin = wfin.at[O:2 * O, g + Cin: g + 4 * Cin].set(
            v_im[:, kh].reshape(O, 3 * Cin))
    wfin = wfin.at[2 * O:3 * O, 5 * GROUP: 5 * GROUP + Cin].set(U[:, :, 0, 0])
    wfin = wfin.at[3 * O:4 * O, 2 * GROUP + 2 * Cin: 2 * GROUP + 3 * Cin].set(T[:, :, 0, 0])

    bfin = jnp.concatenate([b5, c3, u, t]).reshape(Ctot, 1)
    return wfin.astype(w_dtype), bfin


# ----------------------------------------------------------------------------
# Wrapper
# ----------------------------------------------------------------------------
def inception_v3_pallas(x_nchw, params):
    N, Cin, H, W = x_nchw.shape
    O = params['b4c1'][0].shape[0]
    HW = H * W
    Ctot = 4 * O
    GROUP = _round_up(5 * Cin, 8)
    TAIL = _round_up(Cin, 8)
    K = 5 * GROUP + TAIL

    wfin, bfin = _compose_and_pack(params, Cin, O, GROUP, TAIL)
    x_flat = x_nchw.reshape(N, Cin, HW).astype(jnp.float32)

    kernel = functools.partial(_inception_kernel, H, W, Cin, GROUP, TAIL)

    out_flat = pl.pallas_call(
        kernel,
        out_shape=jax.ShapeDtypeStruct((N, Ctot, HW), jnp.float32),
        grid_spec=pltpu.PrefetchScalarGridSpec(
            num_scalar_prefetch=0,
            grid=(N,),
            in_specs=[pl.BlockSpec((1, Cin, HW), lambda n: (n, 0, 0)),
                      pl.BlockSpec((Ctot, K), lambda n: (0, 0)),
                      pl.BlockSpec((Ctot, 1), lambda n: (0, 0))],
            out_specs=pl.BlockSpec((1, Ctot, HW), lambda n: (n, 0, 0)),
        ),
        compiler_params=pltpu.CompilerParams(
            dimension_semantics=("parallel",)),
    )(x_flat, wfin, bfin)

    # NCHW output for PyTorch parity is just a reshape (no transpose needed).
    return out_flat.reshape(N, Ctot, H, W)


# ----------------------------------------------------------------------------
# Pure-JAX (XLA) reference, NCHW, matches PyTorch semantics
# ----------------------------------------------------------------------------
def _reference_forward(x, P):
    def conv(x, w, b, circ):
        if circ:
            x = jnp.pad(x, ((0, 0), (0, 0), (1, 1), (1, 1)), mode='wrap')
        y = jax.lax.conv_general_dilated(
            x, w, (1, 1), 'VALID',
            dimension_numbers=('NCHW', 'OIHW', 'NCHW'),
            precision=jax.lax.Precision.HIGHEST)
        return y + b[None, :, None, None]

    def maxpool(x):
        return jax.lax.reduce_window(
            x, -jnp.inf, jax.lax.max,
            (1, 1, 3, 3), (1, 1, 1, 1),
            [(0, 0), (0, 0), (1, 1), (1, 1)])

    o1 = conv(x, P['b1c1'][0], P['b1c1'][1], False)
    o1 = conv(o1, P['b1c2'][0], P['b1c2'][1], True)
    o1 = conv(o1, P['b1c3'][0], P['b1c3'][1], True)
    o2 = conv(x, P['b2c1'][0], P['b2c1'][1], False)
    o2 = conv(o2, P['b2c2'][0], P['b2c2'][1], True)
    o3 = conv(maxpool(x), P['b3c1'][0], P['b3c1'][1], False)
    o4 = conv(x, P['b4c1'][0], P['b4c1'][1], False)
    return jnp.concatenate([o1, o2, o3, o4], axis=1)


# ----------------------------------------------------------------------------
# Deterministic parameter init (PyTorch conv shapes: (out, in, k, k))
# ----------------------------------------------------------------------------
def _conv_init(key, cout, cin, k):
    bound = 1.0 / float(np.sqrt(cin * k * k))
    wkey, bkey = jax.random.split(key)
    w = jax.random.uniform(wkey, (cout, cin, k, k), jnp.float32, -bound, bound)
    b = jax.random.uniform(bkey, (cout,), jnp.float32, -bound, bound)
    return w, b


if __name__ == "__main__":
    # nDIM=2, in_fts=4, out_fts=16 -> each branch outputs out_fts // 4 = 4 channels.
    N, Cin, H, W = 2, 4, 16, 16
    out_fts = 16
    O = out_fts // 4

    key = jax.random.PRNGKey(0)
    kx, k0, k1, k2, k3, k4, k5, k6 = jax.random.split(key, 8)
    x_nchw = jax.random.normal(kx, (N, Cin, H, W), jnp.float32)

    params = {
        'b1c1': _conv_init(k0, O, Cin, 1),
        'b1c2': _conv_init(k1, O, O, 3),
        'b1c3': _conv_init(k2, O, O, 3),
        'b2c1': _conv_init(k3, O, Cin, 1),
        'b2c2': _conv_init(k4, O, O, 3),
        'b3c1': _conv_init(k5, O, Cin, 1),
        'b4c1': _conv_init(k6, O, Cin, 1),
    }

    out = jax.block_until_ready(inception_v3_pallas(x_nchw, params))
    assert out.shape == (N, out_fts, H, W), out.shape

    ref = jax.block_until_ready(_reference_forward(x_nchw, params))
    np.testing.assert_allclose(np.asarray(out), np.asarray(ref),
                               rtol=1e-2, atol=1e-2)
    print("KERNEL_OK")
</pallas_src>

<mosaic_0001>
module attributes {stable_mosaic.version = 11 : i64} {
  func.func @_inception_kernel(%arg0: i32, %arg1: memref<1x4x256xf32, #tpu.memory_space<vmem>>, %arg2: memref<16x128xbf16, #tpu.memory_space<vmem>>, %arg3: memref<16x1xf32, #tpu.memory_space<vmem>>, %arg4: memref<1x16x256xf32, #tpu.memory_space<vmem>>) attributes {dimension_semantics = [#tpu.dimension_semantics<parallel>], iteration_bounds = array<i64: 2>, scalar_prefetch = 0 : i64, scratch_operands = 0 : i64, tpu.core_type = #tpu.core_type<tc>, window_params = [{transform_indices = @transform_0, window_bounds = array<i64: 1, 4, 256>}, {pipeline_mode = #tpu.pipeline_mode<synchronous>, transform_indices = @transform_1, window_bounds = array<i64: 16, 128>}, {pipeline_mode = #tpu.pipeline_mode<synchronous>, transform_indices = @transform_2, window_bounds = array<i64: 16, 1>}, {transform_indices = @transform_3, window_bounds = array<i64: 1, 16, 256>}]} {
    %c0 = arith.constant 0 : index
    %c0_0 = arith.constant 0 : index
    %c0_1 = arith.constant 0 : index
    %0 = vector.load %arg1[%c0, %c0_0, %c0_1] : memref<1x4x256xf32, #tpu.memory_space<vmem>>, vector<1x4x256xf32>
    %1 = vector.shape_cast %0 : vector<1x4x256xf32> to vector<4x256xf32>
    %2 = tpu.iota {dimensions = array<i32: 1>} : vector<4x256xi32>
    %c15_i32 = arith.constant 15 : i32
    %3 = vector.broadcast %c15_i32 : i32 to vector<4x256xi32>
    %4 = arith.andi %2, %3 : vector<4x256xi32>
    %c16_i32 = arith.constant 16 : i32
    %5 = vector.broadcast %c16_i32 : i32 to vector<4x256xi32>
    %6 = arith.cmpi sge, %2, %5 : vector<4x256xi32>
    %c240_i32 = arith.constant 240 : i32
    %7 = vector.broadcast %c240_i32 : i32 to vector<4x256xi32>
    %8 = arith.cmpi slt, %2, %7 : vector<4x256xi32>
    %c1_i32 = arith.constant 1 : i32
    %9 = vector.broadcast %c1_i32 : i32 to vector<4x256xi32>
    %10 = arith.cmpi sge, %4, %9 : vector<4x256xi32>
    %c14_i32 = arith.constant 14 : i32
    %11 = vector.broadcast %c14_i32 : i32 to vector<4x256xi32>
    %12 = arith.cmpi sle, %4, %11 : vector<4x256xi32>
    %c1_i32_2 = arith.constant 1 : i32
    %13 = vector.broadcast %c1_i32_2 : i32 to vector<4x256xi32>
    %14 = arith.cmpi sle, %4, %13 : vector<4x256xi32>
    %c242_i32 = arith.constant 242 : i32
    %15 = tpu.dynamic_rotate %1 by %c242_i32 dim 1 : vector<4x256xf32>, i32 -> vector<4x256xf32>
    %c2_i32 = arith.constant 2 : i32
    %16 = tpu.dynamic_rotate %1 by %c2_i32 dim 1 : vector<4x256xf32>, i32 -> vector<4x256xf32>
    %17 = arith.select %14, %15, %16 : vector<4x256xi1>, vector<4x256xf32>
    %c0_i32 = arith.constant 0 : i32
    %18 = vector.broadcast %c0_i32 : i32 to vector<4x256xi32>
    %19 = arith.cmpi eq, %4, %18 : vector<4x256xi32>
    %c241_i32 = arith.constant 241 : i32
    %20 = tpu.dynamic_rotate %1 by %c241_i32 dim 1 : vector<4x256xf32>, i32 -> vector<4x256xf32>
    %c1_i32_3 = arith.constant 1 : i32
    %21 = tpu.dynamic_rotate %1 by %c1_i32_3 dim 1 : vector<4x256xf32>, i32 -> vector<4x256xf32>
    %22 = arith.select %19, %20, %21 : vector<4x256xi1>, vector<4x256xf32>
    %c15_i32_4 = arith.constant 15 : i32
    %23 = vector.broadcast %c15_i32_4 : i32 to vector<4x256xi32>
    %24 = arith.cmpi eq, %4, %23 : vector<4x256xi32>
    %c15_i32_5 = arith.constant 15 : i32
    %25 = tpu.dynamic_rotate %1 by %c15_i32_5 dim 1 : vector<4x256xf32>, i32 -> vector<4x256xf32>
    %c255_i32 = arith.constant 255 : i32
    %26 = tpu.dynamic_rotate %1 by %c255_i32 dim 1 : vector<4x256xf32>, i32 -> vector<4x256xf32>
    %27 = arith.select %24, %25, %26 : vector<4x256xi1>, vector<4x256xf32>
    %c14_i32_6 = arith.constant 14 : i32
    %28 = vector.broadcast %c14_i32_6 : i32 to vector<4x256xi32>
    %29 = arith.cmpi sge, %4, %28 : vector<4x256xi32>
    %c14_i32_7 = arith.constant 14 : i32
    %30 = tpu.dynamic_rotate %1 by %c14_i32_7 dim 1 : vector<4x256xf32>, i32 -> vector<4x256xf32>
    %c254_i32 = arith.constant 254 : i32
    %31 = tpu.dynamic_rotate %1 by %c254_i32 dim 1 : vector<4x256xf32>, i32 -> vector<4x256xf32>
    %32 = arith.select %29, %30, %31 : vector<4x256xi1>, vector<4x256xf32>
    %cst = arith.constant 0.000000e+00 : f32
    %33 = vector.broadcast %cst : f32 to vector<4x256xf32>
    %34 = tpu.concatenate %17, %22, %1, %27, %32, %33 in 0 : vector<4x256xf32>, vector<4x256xf32>, vector<4x256xf32>, vector<4x256xf32>, vector<4x256xf32>, vector<4x256xf32> -> vector<24x256xf32>
    %c32_i32 = arith.constant 32 : i32
    %35 = tpu.dynamic_rotate %34 by %c32_i32 dim 1 : vector<24x256xf32>, i32 -> vector<24x256xf32>
    %c16_i32_8 = arith.constant 16 : i32
    %36 = tpu.dynamic_rotate %34 by %c16_i32_8 dim 1 : vector<24x256xf32>, i32 -> vector<24x256xf32>
    %c240_i32_9 = arith.constant 240 : i32
    %37 = tpu.dynamic_rotate %34 by %c240_i32_9 dim 1 : vector<24x256xf32>, i32 -> vector<24x256xf32>
    %c224_i32 = arith.constant 224 : i32
    %38 = tpu.dynamic_rotate %34 by %c224_i32 dim 1 : vector<24x256xf32>, i32 -> vector<24x256xf32>
    %39 = vector.extract_strided_slice %36 {offsets = [4, 0], sizes = [4, 256], strides = [1, 1]} : vector<24x256xf32> to vector<4x256xf32>
    %40 = arith.andi %6, %10 : vector<4x256xi1>
    %cst_10 = arith.constant 0xFF800000 : f32
    %41 = vector.broadcast %cst_10 : f32 to vector<4x256xf32>
    %42 = arith.select %40, %39, %41 : vector<4x256xi1>, vector<4x256xf32>
    %43 = arith.maximumf %1, %42 : vector<4x256xf32>
    %44 = vector.extract_strided_slice %36 {offsets = [8, 0], sizes = [4, 256], strides = [1, 1]} : vector<24x256xf32> to vector<4x256xf32>
    %cst_11 = arith.constant 0xFF800000 : f32
    %45 = vector.broadcast %cst_11 : f32 to vector<4x256xf32>
    %46 = arith.select %6, %44, %45 : vector<4x256xi1>, vector<4x256xf32>
    %47 = arith.maximumf %43, %46 : vector<4x256xf32>
    %48 = vector.extract_strided_slice %36 {offsets = [12, 0], sizes = [4, 256], strides = [1, 1]} : vector<24x256xf32> to vector<4x256xf32>
    %49 = arith.andi %6, %12 : vector<4x256xi1>
    %cst_12 = arith.constant 0xFF800000 : f32
    %50 = vector.broadcast %cst_12 : f32 to vector<4x256xf32>
    %51 = arith.select %49, %48, %50 : vector<4x256xi1>, vector<4x256xf32>
    %52 = arith.maximumf %47, %51 : vector<4x256xf32>
    %53 = vector.extract_strided_slice %34 {offsets = [4, 0], sizes = [4, 256], strides = [1, 1]} : vector<24x256xf32> to vector<4x256xf32>
    %cst_13 = arith.constant 0xFF800000 : f32
    %54 = vector.broadcast %cst_13 : f32 to vector<4x256xf32>
    %55 = arith.select %10, %53, %54 : vector<4x256xi1>, vector<4x256xf32>
    %56 = arith.maximumf %52, %55 : vector<4x256xf32>
    %57 = vector.extract_strided_slice %34 {offsets = [12, 0], sizes = [4, 256], strides = [1, 1]} : vector<24x256xf32> to vector<4x256xf32>
    %cst_14 = arith.constant 0xFF800000 : f32
    %58 = vector.broadcast %cst_14 : f32 to vector<4x256xf32>
    %59 = arith.select %12, %57, %58 : vector<4x256xi1>, vector<4x256xf32>
    %60 = arith.maximumf %56, %59 : vector<4x256xf32>
    %61 = vector.extract_strided_slice %37 {offsets = [4, 0], sizes = [4, 256], strides = [1, 1]} : vector<24x256xf32> to vector<4x256xf32>
    %62 = arith.andi %8, %10 : vector<4x256xi1>
    %cst_15 = arith.constant 0xFF800000 : f32
    %63 = vector.broadcast %cst_15 : f32 to vector<4x256xf32>
    %64 = arith.select %62, %61, %63 : vector<4x256xi1>, vector<4x256xf32>
    %65 = arith.maximumf %60, %64 : vector<4x256xf32>
    %66 = vector.extract_strided_slice %37 {offsets = [8, 0], sizes = [4, 256], strides = [1, 1]} : vector<24x256xf32> to vector<4x256xf32>
    %cst_16 = arith.constant 0xFF800000 : f32
    %67 = vector.broadcast %cst_16 : f32 to vector<4x256xf32>
    %68 = arith.select %8, %66, %67 : vector<4x256xi1>, vector<4x256xf32>
    %69 = arith.maximumf %65, %68 : vector<4x256xf32>
    %70 = vector.extract_strided_slice %37 {offsets = [12, 0], sizes = [4, 256], strides = [1, 1]} : vector<24x256xf32> to vector<4x256xf32>
    %71 = arith.andi %8, %12 : vector<4x256xi1>
    %cst_17 = arith.constant 0xFF800000 : f32
    %72 = vector.broadcast %cst_17 : f32 to vector<4x256xf32>
    %73 = arith.select %71, %70, %72 : vector<4x256xi1>, vector<4x256xf32>
    %74 = arith.maximumf %69, %73 : vector<4x256xf32>
    %cst_18 = arith.constant 0.000000e+00 : f32
    %75 = vector.broadcast %cst_18 : f32 to vector<4x256xf32>
    %76 = tpu.concatenate %35, %36, %34, %37, %38, %74, %75 in 0 : vector<24x256xf32>, vector<24x256xf32>, vector<24x256xf32>, vector<24x256xf32>, vector<24x256xf32>, vector<4x256xf32>, vector<4x256xf32> -> vector<128x256xf32>
    %c0_19 = arith.constant 0 : index
    %c0_20 = arith.constant 0 : index
    %77 = vector.load %arg2[%c0_19, %c0_20] : memref<16x128xbf16, #tpu.memory_space<vmem>>, vector<16x128xbf16>
    %78 = arith.truncf %76 : vector<128x256xf32> to vector<128x256xbf16>
    %cst_21 = arith.constant dense<0.000000e+00> : vector<16x256xf32>
    %79 = tpu.matmul %77, %78, %cst_21 {dimension_numbers = #tpu.dot_dimension_numbers<[1], [0], [0], [1], [0, 0, 1, 1], [], []>} : vector<16x128xbf16>, vector<128x256xbf16>, vector<16x256xf32> -> vector<16x256xf32>
    %c0_22 = arith.constant 0 : index
    %c0_23 = arith.constant 0 : index
    %80 = vector.load %arg3[%c0_22, %c0_23] : memref<16x1xf32, #tpu.memory_space<vmem>>, vector<16x1xf32>
    %81 = vector.broadcast %80 : vector<16x1xf32> to vector<16x256xf32>
    %82 = arith.addf %79, %81 : vector<16x256xf32>
    %c0_24 = arith.constant 0 : index
    %c0_25 = arith.constant 0 : index
    %c0_26 = arith.constant 0 : index
    %83 = vector.load %arg4[%c0_24, %c0_25, %c0_26] : memref<1x16x256xf32, #tpu.memory_space<vmem>>, vector<1x16x256xf32>
    %84 = vector.shape_cast %83 : vector<1x16x256xf32> to vector<16x256xf32>
    %85 = vector.shape_cast %82 : vector<16x256xf32> to vector<1x16x256xf32>
    tpu.vector_store %arg4[%c0_24, %c0_25, %c0_26], %85 {strides = array<i32>} : memref<1x16x256xf32, #tpu.memory_space<vmem>>, vector<1x16x256xf32>,
    return
  }
  func.func @transform_0(%arg0: i32) -> (i32, i32, i32) {
    %c0_i32 = arith.constant 0 : i32
    %c0_i32_0 = arith.constant 0 : i32
    %c0_i32_1 = arith.constant 0 : i32
    return %arg0, %c0_i32, %c0_i32_0 : i32, i32, i32
  }
  func.func @transform_1(%arg0: i32) -> (i32, i32) {
    %c0_i32 = arith.constant 0 : i32
    %c0_i32_0 = arith.constant 0 : i32
    %c0_i32_1 = arith.constant 0 : i32
    return %c0_i32, %c0_i32_0 : i32, i32
  }
  func.func @transform_2(%arg0: i32) -> (i32, i32) {
    %c0_i32 = arith.constant 0 : i32
    %c0_i32_0 = arith.constant 0 : i32
    %c0_i32_1 = arith.constant 0 : i32
    return %c0_i32, %c0_i32_0 : i32, i32
  }
  func.func @transform_3(%arg0: i32) -> (i32, i32, i32) {
    %c0_i32 = arith.constant 0 : i32
    %c0_i32_0 = arith.constant 0 : i32
    %c0_i32_1 = arith.constant 0 : i32
    return %arg0, %c0_i32, %c0_i32_0 : i32, i32, i32
  }
}

</mosaic_0001>

<llo_original>
// kernel: tpu_custom_call.1
$region0: #{tpu_custom_call.1}
  #allocation0 [shape = 'u32[]', space=smem, size = 0x4, offset = 0x4, fixed_abs, tag = 'smem constant byte address 0x4 - core index']
  #allocation1 [shape = 'u32[144,128]{1,0:T(1,128)}', space=vmem, size = 0x12000, scoped, tag = 'internal scratch']
  %s0 = inlined_call_operand.vmem [shape: f32[2,4,256], index: 0, kind: input, shape index: {}]
  %s1 = inlined_call_operand.hbm [shape: bf16[16,128], index: 1, kind: input, shape index: {}]
  %s2 = inlined_call_operand.vmem [shape: f32[16,1], index: 2, kind: input, shape index: {}]
  %s3 = inlined_call_operand.hbm [shape: f32[2,16,256], index: 3, kind: output, shape index: {}]
  %s4 = sld [smem:[#allocation0]]
  $region49: #{tpu_custom_call.1} parent=0
    _
  %s6 = ssub.s32 1, %s4
  %s7 = scalar_select 0, %s6, %s4
  $region1: #{tpu_custom_call.1} parent=0
    #allocation2 [shape = 'u8[4096]{0}', space=vmem, size = 0x1000, scoped, tag = 'input window, operand 1, single buffered']
    #allocation3 [shape = 's32[2]{0}', space=sflag, size = 0x8, scoped, tag = 'scoped memory for tpu_custom_call.1']
    #allocation4 [shape = 's32[2]{0}', space=sflag, size = 0x8, scoped, tag = 'scoped memory for tpu_custom_call.1']
    #allocation5 [shape = 'u8[32768]{0}', space=vmem, size = 0x8000, scoped, tag = 'output window, operand 0']
    %8 = vsyncpa [#allocation3], 0
    %9 = vsyncpa [#allocation4], 0
    %s10 = scalar_lea.sflag [#allocation4], 1
    %11 = vsyncpa %s10, 0
    loop: start=0, step=1, limit=4
    $region2: #{tpu_custom_call.1} parent=1 // loop_pre_header
      _
    $region3: #{tpu_custom_call.1} parent=1 // loop_header
      %s13 = sphi 0, %s17
      %p14 = scmp.ge.s32.totalorder %s13, 4
      %s23 = sphi 0, %s25
      %s26 = sphi 0, %s23
      %s27 = sphi 0, %s26
      %s43 = sphi 0, %s27
      %s47 = sphi 0, %s47
      %s49 = sphi 0, %s47
      %s50 = sphi 0, %s49
      %s64 = sphi 0, %s50
      %s68 = sphi 0, %s68
      %s70 = sphi 0, %s68
      %s71 = sphi 0, %s70
      %s85 = sphi 0, %s71
      %s91 = sphi 0, %s93
      %s94 = sphi 0, %s91
      %s95 = sphi 0, %s94
      %s111 = sphi 0, %s95
    $region4: #{tpu_custom_call.1} parent=1 // loop_header_branch
      %16 = sbr.rel (%p14) target = $region8
    $region5: #{tpu_custom_call.1} parent=1 // loop_body
      %s18 = ssub.s32 %s13, 1
      %s19 = ssub.s32 %s13, 2
      %s20 = sadd.s32 %s13, 1
      %s21 = ssub.s32 %s13, %s20
      %p22 = scmp.eq.s32.totalorder %s21, 0
      %s24 = sadd.s32 %s23, 1
      %s25 = scalar_select %p22, %s23, %s24
      %p28 = pneg %p22
      %p29 = scmp.eq.s32.totalorder %s13, 1
      %p30 = por %p28, %p29
      %p31 = scmp.ne.s32.totalorder %s23, %s26
      %p32 = scmp.eq.s32.totalorder %s13, 0
      %p33 = por %p31, %p32
      %p34 = scmp.ne.s32.totalorder %s23, %s26
      %p35 = scmp.eq.s32.totalorder %s18, 1
      %p36 = por %p34, %p35
      %p37 = scmp.ne.s32.totalorder %s26, %s27
      %p38 = scmp.eq.s32.totalorder %s18, 0
      %p39 = por %p37, %p38
      %p40 = scmp.ne.s32.totalorder %s26, %s27
      %p41 = scmp.eq.s32.totalorder %s19, 1
      %p42 = por %p40, %p41
      %p44 = scmp.ne.s32.totalorder %s27, %s43
      %p45 = scmp.eq.s32.totalorder %s19, 0
      %p46 = por %p44, %p45
      %s48 = sadd.s32 %s47, 1
      %p51 = scmp.eq.s32.totalorder %s13, 1
      %p52 = scmp.ne.s32.totalorder %s47, %s49
      %p53 = scmp.eq.s32.totalorder %s13, 0
      %p54 = por %p52, %p53
      %p55 = scmp.ne.s32.totalorder %s47, %s49
      %p56 = scmp.eq.s32.totalorder %s18, 1
      %p57 = por %p55, %p56
      %p58 = scmp.ne.s32.totalorder %s49, %s50
      %p59 = scmp.eq.s32.totalorder %s18, 0
      %p60 = por %p58, %p59
      %p61 = scmp.ne.s32.totalorder %s49, %s50
      %p62 = scmp.eq.s32.totalorder %s19, 1
      %p63 = por %p61, %p62
      %p65 = scmp.ne.s32.totalorder %s50, %s64
      %p66 = scmp.eq.s32.totalorder %s19, 0
      %p67 = por %p65, %p66
      %s69 = sadd.s32 %s68, 1
      %p72 = scmp.eq.s32.totalorder %s13, 1
      %p73 = scmp.ne.s32.totalorder %s68, %s70
      %p74 = scmp.eq.s32.totalorder %s13, 0
      %p75 = por %p73, %p74
      %p76 = scmp.ne.s32.totalorder %s68, %s70
      %p77 = scmp.eq.s32.totalorder %s18, 1
      %p78 = por %p76, %p77
      %p79 = scmp.ne.s32.totalorder %s70, %s71
      %p80 = scmp.eq.s32.totalorder %s18, 0
      %p81 = por %p79, %p80
      %p82 = scmp.ne.s32.totalorder %s70, %s71
      %p83 = scmp.eq.s32.totalorder %s19, 1
      %p84 = por %p82, %p83
      %p86 = scmp.ne.s32.totalorder %s71, %s85
      %p87 = scmp.eq.s32.totalorder %s19, 0
      %p88 = por %p86, %p87
      %s89 = ssub.s32 %s13, %s20
      %p90 = scmp.eq.s32.totalorder %s89, 0
      %s92 = sadd.s32 %s91, 1
      %s93 = scalar_select %p90, %s91, %s92
      %p96 = pneg %p90
      %p97 = scmp.eq.s32.totalorder %s13, 1
      %p98 = por %p96, %p97
      %p99 = scmp.ne.s32.totalorder %s91, %s94
      %p100 = scmp.eq.s32.totalorder %s13, 0
      %p101 = por %p99, %p100
      %p102 = scmp.ne.s32.totalorder %s91, %s94
      %p103 = scmp.eq.s32.totalorder %s18, 1
      %p104 = por %p102, %p103
      %p105 = scmp.ne.s32.totalorder %s94, %s95
      %p106 = scmp.eq.s32.totalorder %s18, 0
      %p107 = por %p105, %p106
      %p108 = scmp.ne.s32.totalorder %s94, %s95
      %p109 = scmp.eq.s32.totalorder %s19, 1
      %p110 = por %p108, %p109
      %p112 = scmp.ne.s32.totalorder %s95, %s111
      %p113 = scmp.eq.s32.totalorder %s19, 0
      %p114 = por %p112, %p113
      %p115 = scmp.le.s32.totalorder 1, %s13
      %p116 = scmp.lt.s32.totalorder %s13, 3
      %p117 = pnand %p115, %p116
      %p118 = pneg %p117
      // Predicated region
      $region9: #{tpu_custom_call.1} parent=5 // pred_check
        _
      $region10: #{tpu_custom_call.1} parent=5 // pred_check_branch
        %120 = sbr.rel (%p117) target = $region12
      $region11: #{tpu_custom_call.1} parent=5 // pred_region
        %s121 = ssub.s32 %s13, 1
        // Predicated region
        $region13: #{tpu_custom_call.1} parent=11 // pred_check
          %p122 = pneg %p60
        $region14: #{tpu_custom_call.1} parent=11 // pred_check_branch
          %124 = sbr.rel (%p122) target = $region16
        $region15: #{tpu_custom_call.1} parent=11 // pred_region
          %s126 = ssub.s32 128, 128
          %127 = vsyncadd [#allocation3], %s126
          %s128 = sshll.u32 [#allocation2], 4
          %s129 = int_to_ptr.vmem [resolvable:$true] %s128
          %134 = dma.hbm_to_vmem [thread:$0]  %s1, 128, %s129, [#allocation3], 64, 64, 4
        $region16: #{tpu_custom_call.1} parent=11 // pred_fallthru
          _
        // Predicated region
        $region17: #{tpu_custom_call.1} parent=11 // pred_check
          %p135 = pneg %p81
        $region18: #{tpu_custom_call.1} parent=11 // pred_check_branch
          %137 = sbr.rel (%p135) target = $region20
        $region19: #{tpu_custom_call.1} parent=11 // pred_region
          _
        $region20: #{tpu_custom_call.1} parent=11 // pred_fallthru
          _
      $region12: #{tpu_custom_call.1} parent=5 // pred_fallthru
        _
      %p138 = scmp.lt.s32.totalorder %s13, 2
      // Predicated region
      $region21: #{tpu_custom_call.1} parent=5 // pred_check
        %p139 = pneg %p138
      $region22: #{tpu_custom_call.1} parent=5 // pred_check_branch
        %141 = sbr.rel (%p139) target = $region24
      $region23: #{tpu_custom_call.1} parent=5 // pred_region
        // Predicated region
        $region25: #{tpu_custom_call.1} parent=23 // pred_check
          %p142 = pneg %p33
        $region26: #{tpu_custom_call.1} parent=23 // pred_check_branch
          %144 = sbr.rel (%p142) target = $region28
        $region27: #{tpu_custom_call.1} parent=23 // pred_region
          %p145 = scmp.lt.s32.totalorder %s13, 1
          %s146 = scalar_select %p145, %s13, 1
          %s147 = smul.addr %s146, 2
          %s148 = smul.addr %s147, 4
          %s149 = scalar_lea.vmem %s0, %s148
        $region28: #{tpu_custom_call.1} parent=23 // pred_fallthru
          _
      $region24: #{tpu_custom_call.1} parent=5 // pred_fallthru
        _
      %p150 = scmp.le.s32.totalorder 1, %s13
      %p151 = scmp.lt.s32.totalorder %s13, 3
      %p152 = pnand %p150, %p151
      %p153 = pneg %p152
      // Predicated region
      $region29: #{tpu_custom_call.1} parent=5 // pred_check
        _
      $region30: #{tpu_custom_call.1} parent=5 // pred_check_branch
        %155 = sbr.rel (%p152) target = $region32
      $region31: #{tpu_custom_call.1} parent=5 // pred_region
        %s156 = ssub.s32 %s13, 1
        // Predicated region
        $region33: #{tpu_custom_call.1} parent=31 // pred_check
          %p157 = pneg %p60
        $region34: #{tpu_custom_call.1} parent=31 // pred_check_branch
          %159 = sbr.rel (%p157) target = $region36
        $region35: #{tpu_custom_call.1} parent=31 // pred_region
          %160 = dma.done [#allocation3], 128
        $region36: #{tpu_custom_call.1} parent=31 // pred_fallthru
          _
        %p161 = scmp.lt.s32.totalorder %s18, 1
        %s162 = scalar_select %p161, %s18, 1
        %s163 = smul.addr %s162, 2
        %s164 = smul.addr %s163, 4
        %s165 = scalar_lea.vmem %s0, %s164
        %p166 = pneg %p39
        %p167 = pneg %p36
        %p168 = pneg %p60
        %p169 = pneg %p57
        %p170 = pneg %p81
        %p171 = pneg %p78
        %p172 = pneg %p107
        %p173 = pneg %p104
        %s174 = sand.u32 %s94, 1
        %s175 = scalar_lea.sflag [#allocation4], %s174
        %s176 = sand.u32 %s94, 1
        %s177 = smul.addr %s176, 32
        %s178 = scalar_lea.vmem [#allocation5], %s177
        %p179 = scmp.lt.s32.totalorder %s18, 1
        %s180 = scalar_select %p179, %s18, 1
        %s181 = smul.addr %s180, 2
        %s182 = smul.addr %s181, 4
        %s183 = scalar_lea.vmem %s0, %s182
        %v185 = vld [vmem:[%s183] sm:$0xff]
        %v186 = vlaneseq
        %v187 = vand.u32 %v186, 127
        %v188 = vadd.s32 %v187, 128
        %v189 = vand.u32 %v187, 15
        %v190 = vand.u32 %v188, 15
        %vm191 = vcmp.ge.s32.totalorder %v187, 16
        %vm192 = vcmp.ge.s32.totalorder %v188, 16
        %vm193 = vcmp.lt.s32.totalorder %v187, 240
        %vm194 = vcmp.lt.s32.totalorder %v188, 240
        %vm195 = vcmp.ge.s32.totalorder %v189, 1
        %vm196 = vcmp.ge.s32.totalorder %v190, 1
        %vm197 = vcmp.le.s32.totalorder %v189, 14
        %vm198 = vcmp.le.s32.totalorder %v190, 14
        %vm199 = vcmp.le.s32.totalorder %v189, 1
        %vm200 = vcmp.le.s32.totalorder %v190, 1
        %v202 = vcombine.high %v185, %v185
        %204 = vrot.lane.b32.xlu0 %v185, 114
        %v205 = vpop.permute.xlu0 %204
        %206 = vrot.lane.b32.xlu0 %v202, 114
        %v207 = vpop.permute.xlu0 %206
        %vm208 = vcmp.lt.s32.totalorder %v187, 114
        %v209 = vsel %vm208, %v205, %v207
        %v210 = vsel %vm208, %v207, %v205
        %211 = vrot.lane.b32.xlu0 %v185, 2
        %v212 = vpop.permute.xlu0 %211
        %213 = vrot.lane.b32.xlu0 %v202, 2
        %v214 = vpop.permute.xlu0 %213
        %vm215 = vcmp.lt.s32.totalorder %v187, 2
        %v216 = vsel %vm215, %v212, %v214
        %v217 = vsel %vm215, %v214, %v212
        %v218 = vsel %vm199, %v209, %v217
        %v219 = vsel %vm200, %v210, %v216
        %vm220 = vcmp.eq.s32.totalorder %v189, 0
        %vm221 = vcmp.eq.s32.totalorder %v190, 0
        %222 = vrot.lane.b32.xlu0 %v185, 113
        %v223 = vpop.permute.xlu0 %222
        %224 = vrot.lane.b32.xlu0 %v202, 113
        %v225 = vpop.permute.xlu0 %224
        %vm226 = vcmp.lt.s32.totalorder %v187, 113
        %v227 = vsel %vm226, %v223, %v225
        %v228 = vsel %vm226, %v225, %v223
        %229 = vrot.lane.b32.xlu0 %v185, 1
        %v230 = vpop.permute.xlu0 %229
        %231 = vrot.lane.b32.xlu0 %v202, 1
        %v232 = vpop.permute.xlu0 %231
        %vm233 = vcmp.lt.s32.totalorder %v187, 1
        %v234 = vsel %vm233, %v230, %v232
        %v235 = vsel %vm233, %v232, %v230
        %v236 = vsel %vm220, %v227, %v235
        %v237 = vsel %vm221, %v228, %v234
        %vm238 = vcmp.eq.s32.totalorder %v189, 15
        %vm239 = vcmp.eq.s32.totalorder %v190, 15
        %240 = vrot.lane.b32.xlu0 %v185, 15
        %v241 = vpop.permute.xlu0 %240
        %242 = vrot.lane.b32.xlu0 %v202, 15
        %v243 = vpop.permute.xlu0 %242
        %vm244 = vcmp.lt.s32.totalorder %v187, 15
        %v245 = vsel %vm244, %v241, %v243
        %v246 = vsel %vm244, %v243, %v241
        %247 = vrot.lane.b32.xlu0 %v185, 127
        %v248 = vpop.permute.xlu0 %247
        %249 = vrot.lane.b32.xlu0 %v202, 127
        %v250 = vpop.permute.xlu0 %249
        %vm251 = vcmp.lt.s32.totalorder %v187, 127
        %v252 = vsel %vm251, %v248, %v250
        %v253 = vsel %vm251, %v250, %v248
        %v254 = vsel %vm238, %v246, %v252
        %v255 = vsel %vm239, %v245, %v253
        %vm256 = vcmp.ge.s32.totalorder %v189, 14
        %vm257 = vcmp.ge.s32.totalorder %v190, 14
        %258 = vrot.lane.b32.xlu0 %v185, 14
        %v259 = vpop.permute.xlu0 %258
        %260 = vrot.lane.b32.xlu0 %v202, 14
        %v261 = vpop.permute.xlu0 %260
        %vm262 = vcmp.lt.s32.totalorder %v187, 14
        %v263 = vsel %vm262, %v259, %v261
        %v264 = vsel %vm262, %v261, %v259
        %265 = vrot.lane.b32.xlu0 %v185, 126
        %v266 = vpop.permute.xlu0 %265
        %267 = vrot.lane.b32.xlu0 %v202, 126
        %v268 = vpop.permute.xlu0 %267
        %vm269 = vcmp.lt.s32.totalorder %v187, 126
        %v270 = vsel %vm269, %v266, %v268
        %v271 = vsel %vm269, %v268, %v266
        %v272 = vsel %vm256, %v264, %v270
        %v273 = vsel %vm257, %v263, %v271
        %v276 = vrot.slane %v236, 4
        %v277 = vrot.slane %v237, 4
        %v282 = vrot.slane %v254, 4
        %v283 = vrot.slane %v255, 4
        %vm286 = vcmask 1043456
        %v287 = vsel %vm286, %v218, %v276
        %v288 = vsel %vm286, %v219, %v277
        %v289 = vsel %vm286, %v185, %v282
        %v290 = vsel %vm286, %v202, %v283
        %v291 = vsel %vm286, %v272, 0.0
        %v292 = vsel %vm286, %v273, 0.0
        %293 = vrot.lane.b32.xlu0 %v287, 32
        %v294 = vpop.permute.xlu0 %293
        %295 = vrot.lane.b32.xlu0 %v289, 32
        %v296 = vpop.permute.xlu0 %295
        %297 = vrot.lane.b32.xlu0 %v291, 32
        %v298 = vpop.permute.xlu0 %297
        %299 = vrot.lane.b32.xlu0 %v288, 32
        %v300 = vpop.permute.xlu0 %299
        %301 = vrot.lane.b32.xlu0 %v290, 32
        %v302 = vpop.permute.xlu0 %301
        %303 = vrot.lane.b32.xlu0 %v292, 32
        %v304 = vpop.permute.xlu0 %303
        %vm305 = vcmp.lt.s32.totalorder %v187, 32
        %v306 = vsel %vm305, %v294, %v300
        %v307 = vsel %vm305, %v296, %v302
        %v308 = vsel %vm305, %v298, %v304
        %v309 = vsel %vm305, %v300, %v294
        %v310 = vsel %vm305, %v302, %v296
        %v311 = vsel %vm305, %v304, %v298
        %312 = vrot.lane.b32.xlu0 %v287, 16
        %v313 = vpop.permute.xlu0 %312
        %314 = vrot.lane.b32.xlu0 %v289, 16
        %v315 = vpop.permute.xlu0 %314
        %316 = vrot.lane.b32.xlu0 %v291, 16
        %v317 = vpop.permute.xlu0 %316
        %318 = vrot.lane.b32.xlu0 %v288, 16
        %v319 = vpop.permute.xlu0 %318
        %320 = vrot.lane.b32.xlu0 %v290, 16
        %v321 = vpop.permute.xlu0 %320
        %322 = vrot.lane.b32.xlu0 %v292, 16
        %v323 = vpop.permute.xlu0 %322
        %vm324 = vcmp.lt.s32.totalorder %v187, 16
        %v325 = vsel %vm324, %v313, %v319
        %v326 = vsel %vm324, %v315, %v321
        %v327 = vsel %vm324, %v317, %v323
        %v328 = vsel %vm324, %v319, %v313
        %v329 = vsel %vm324, %v321, %v315
        %v330 = vsel %vm324, %v323, %v317
        %331 = vrot.lane.b32.xlu0 %v287, 112
        %v332 = vpop.permute.xlu0 %331
        %333 = vrot.lane.b32.xlu0 %v289, 112
        %v334 = vpop.permute.xlu0 %333
        %335 = vrot.lane.b32.xlu0 %v291, 112
        %v336 = vpop.permute.xlu0 %335
        %337 = vrot.lane.b32.xlu0 %v288, 112
        %v338 = vpop.permute.xlu0 %337
        %339 = vrot.lane.b32.xlu0 %v290, 112
        %v340 = vpop.permute.xlu0 %339
        %341 = vrot.lane.b32.xlu0 %v292, 112
        %v342 = vpop.permute.xlu0 %341
        %vm343 = vcmp.lt.s32.totalorder %v187, 112
        %v344 = vsel %vm343, %v332, %v338
        %v345 = vsel %vm343, %v334, %v340
        %v346 = vsel %vm343, %v336, %v342
        %v347 = vsel %vm343, %v338, %v332
        %v348 = vsel %vm343, %v340, %v334
        %v349 = vsel %vm343, %v342, %v336
        %350 = vrot.lane.b32.xlu0 %v287, 96
        %v351 = vpop.permute.xlu0 %350
        %352 = vrot.lane.b32.xlu0 %v289, 96
        %v353 = vpop.permute.xlu0 %352
        %354 = vrot.lane.b32.xlu0 %v291, 96
        %v355 = vpop.permute.xlu0 %354
        %356 = vrot.lane.b32.xlu0 %v288, 96
        %v357 = vpop.permute.xlu0 %356
        %358 = vrot.lane.b32.xlu0 %v290, 96
        %v359 = vpop.permute.xlu0 %358
        %360 = vrot.lane.b32.xlu0 %v292, 96
        %v361 = vpop.permute.xlu0 %360
        %vm362 = vcmp.lt.s32.totalorder %v187, 96
        %v363 = vsel %vm362, %v351, %v357
        %v364 = vsel %vm362, %v353, %v359
        %v365 = vsel %vm362, %v355, %v361
        %v366 = vsel %vm362, %v357, %v351
        %v367 = vsel %vm362, %v359, %v353
        %v368 = vsel %vm362, %v361, %v355
        %vm369 = vmand %vm191, %vm195
        %vm370 = vmand %vm192, %vm196
        %v371 = vsel %vm369, %v328, -inf
        %v372 = vsel %vm370, %v325, -inf
        %v375 = vcombine.high %v371, %v372
        %v377 = vmax.f32 %v185, %v375
        %v378 = vsel %vm191, %v329, -inf
        %v379 = vsel %vm192, %v326, -inf
        %v382 = vcombine.low %v378, %v379
        %v384 = vmax.f32 %v377, %v382
        %vm385 = vmand %vm191, %vm197
        %vm386 = vmand %vm192, %vm198
        %v387 = vsel %vm385, %v329, -inf
        %v388 = vsel %vm386, %v326, -inf
        %v391 = vcombine.high %v387, %v388
        %v393 = vmax.f32 %v384, %v391
        %v394 = vsel %vm195, %v287, -inf
        %v395 = vsel %vm196, %v288, -inf
        %v398 = vcombine.high %v394, %v395
        %v400 = vmax.f32 %v393, %v398
        %v401 = vsel %vm197, %v289, -inf
        %v402 = vsel %vm198, %v290, -inf
        %v405 = vcombine.high %v401, %v402
        %v407 = vmax.f32 %v400, %v405
        %vm408 = vmand %vm193, %vm195
        %vm409 = vmand %vm194, %vm196
        %v410 = vsel %vm408, %v344, -inf
        %v411 = vsel %vm409, %v347, -inf
        %v414 = vcombine.high %v410, %v411
        %v416 = vmax.f32 %v407, %v414
        %v417 = vsel %vm193, %v345, -inf
        %v418 = vsel %vm194, %v348, -inf
        %v421 = vcombine.low %v417, %v418
        %v423 = vmax.f32 %v416, %v421
        %vm424 = vmand %vm193, %vm197
        %vm425 = vmand %vm194, %vm198
        %v426 = vsel %vm424, %v345, -inf
        %v427 = vsel %vm425, %v348, -inf
        %v430 = vcombine.high %v426, %v427
        %v432 = vmax.f32 %v423, %v430
        %v434 = vcombine.high %v432, %v432
        %v436 = vsel %vm286, %v432, 0.0
        %v437 = vsel %vm286, %v434, 0.0
        %v438 = vld [vmem:[#allocation2] sm:$0xf]
        %v439 = vld [vmem:[#allocation2 + $0x4] sm:$0xf]
        %v440 = vpack.c.bf16 %v310, %v309
        %v441 = vpack.c.bf16 %v307, %v306
        %v442 = vpack.c.bf16 %v328, %v311
        %v443 = vpack.c.bf16 %v325, %v308
        %v444 = vpack.c.bf16 %v330, %v329
        %v445 = vpack.c.bf16 %v327, %v326
        %v446 = vpack.c.bf16 %v289, %v287
        %v447 = vpack.c.bf16 %v290, %v288
        %v448 = vpack.c.bf16 %v344, %v291
        %v449 = vpack.c.bf16 %v347, %v292
        %v450 = vpack.c.bf16 %v346, %v345
        %v451 = vpack.c.bf16 %v349, %v348
        %v452 = vpack.c.bf16 %v364, %v363
        %v453 = vpack.c.bf16 %v367, %v366
        %v454 = vpack.c.bf16 %v436, %v365
        %v455 = vpack.c.bf16 %v437, %v368
        %v456 = vld [vmem:[%s2] sm:$0xff]
        %v457 = vld [vmem:[%s2 + $0x8] sm:$0xff]
        %459 = vset.pattern.permute.xlu0 0
        %460 = vperm.xlu0 %459, %v456
        %v461 = vpop.permute.xlu0 %460
        %464 = vset.pattern.permute.xlu0 0
        %465 = vperm.xlu0 %464, %v457
        %v466 = vpop.permute.xlu0 %465
        %v470 = vunpack.c.l.b16 %v438
        %v471 = vunpack.c.l.b16 %v439
        %v472 = vpack.c.b16 %v471, %v470
        %474 = vmatprep.subr.bf16.mxu0 %v455
        %475 = vmatpush1.bf16.msra.mxu0 %v454
        %476 = vmatprep.subr.bf16.mxu0 %v453
        %477 = vmatpush1.bf16.msra.mxu0 %v452
        %478 = vmatprep.subr.bf16.mxu0 %v451
        %479 = vmatpush1.bf16.msra.mxu0 %v450
        %480 = vmatprep.subr.bf16.mxu0 %v449
        %481 = vmatpush1.bf16.msra.mxu0 %v448
        %482 = vmatprep.subr.bf16.mxu0 %v447
        %483 = vmatpush1.bf16.msra.mxu0 %v446
        %484 = vmatprep.subr.bf16.mxu0 %v445
        %485 = vmatpush1.bf16.msra.mxu0 %v444
        %486 = vmatprep.subr.bf16.mxu0 %v443
        %487 = vmatpush1.bf16.msra.mxu0 %v442
        %488 = vmatprep.subr.bf16.mxu0 %v441
        %489 = vmatpush1.bf16.msra.mxu0 %v440
        %490 = vmatprep.subr.bf16.mxu0 0
        %491 = vmatpush2.bf16.msra.mxu0 0
        %492 = vmatprep.subr.bf16.mxu0 0
        %493 = vmatpush2.bf16.msra.mxu0 0
        %494 = vmatprep.subr.bf16.mxu0 0
        %495 = vmatpush2.bf16.msra.mxu0 0
        %496 = vmatprep.subr.bf16.mxu0 0
        %497 = vmatpush2.bf16.msra.mxu0 0
        %498 = vmatprep.subr.bf16.mxu0 0
        %499 = vmatpush2.bf16.msra.mxu0 0
        %500 = vmatprep.subr.bf16.mxu0 0
        %501 = vmatpush2.bf16.msra.mxu0 0
        %502 = vmatprep.subr.bf16.mxu0 0
        %503 = vmatpush2.bf16.msra.mxu0 0
        %504 = vmatprep.subr.bf16.mxu0 0
        %505 = vmatpush2.bf16.msra.mxu0 0
        %506 = vmatprep.mubr.bf16.mxu0 0
        %507 = vmatmul.mubr.bf16.gmra.mxu0 %v472
        %v508 = vpop.f32.mrf.mxu0
        %v509 = vadd.f32 %v461, %v508
        %v510 = vpop.f32.mrf.mxu0
        %v511 = vadd.f32 %v461, %v510
        %v512 = vpop.f32.mrf.mxu0
        %v513 = vadd.f32 %v466, %v512
        %v514 = vpop.f32.mrf.mxu0
        %v515 = vadd.f32 %v466, %v514
        %516 = vdwg.mxu0
        %517 = vst [vmem:[%s178] sm:$0xff] %v509
        %518 = vst [vmem:[%s178 + $0x8] sm:$0xff] %v511
        %519 = vst [vmem:[%s178 + $0x10] sm:$0xff] %v513
        %520 = vst [vmem:[%s178 + $0x18] sm:$0xff] %v515
        %s521 = sand.u32 %s94, 1
        %s522 = scalar_lea.sflag [#allocation4], %s521
        %s523 = sand.u32 %s94, 1
        %s524 = smul.addr %s523, 32
        %s525 = scalar_lea.vmem [#allocation5], %s524
        // Predicated region
        $region37: #{tpu_custom_call.1} parent=31 // pred_check
          %p526 = pneg %p104
        $region38: #{tpu_custom_call.1} parent=31 // pred_check_branch
          %528 = sbr.rel (%p526) target = $region40
        $region39: #{tpu_custom_call.1} parent=31 // pred_region
          %s530 = ssub.s32 512, 512
          %531 = vsyncadd %s522, %s530
          %s532 = smul.addr %s18, 4
          %s533 = smul.addr %s532, 128
          %s534 = scalar_lea.hbm %s3, %s533
          %s535 = sshll.u32 %s525, 4
          %s536 = int_to_ptr.vmem [resolvable:$true] %s535
          %541 = dma.vmem_to_hbm [thread:$0]  %s536, 512, %s534, %s522, 256, 256, 16
        $region40: #{tpu_custom_call.1} parent=31 // pred_fallthru
          _
      $region32: #{tpu_custom_call.1} parent=5 // pred_fallthru
        _
      %p542 = scmp.le.s32.totalorder 2, %s13
      // Predicated region
      $region41: #{tpu_custom_call.1} parent=5 // pred_check
        %p543 = pneg %p542
      $region42: #{tpu_custom_call.1} parent=5 // pred_check_branch
        %545 = sbr.rel (%p543) target = $region44
      $region43: #{tpu_custom_call.1} parent=5 // pred_region
        %s546 = ssub.s32 %s13, 2
        // Predicated region
        $region45: #{tpu_custom_call.1} parent=43 // pred_check
          %p547 = pneg %p110
        $region46: #{tpu_custom_call.1} parent=43 // pred_check_branch
          %549 = sbr.rel (%p547) target = $region48
        $region47: #{tpu_custom_call.1} parent=43 // pred_region
          %s550 = sand.u32 %s95, 1
          %s551 = scalar_lea.sflag [#allocation4], %s550
          %s552 = sand.u32 %s95, 1
          %s553 = smul.addr %s552, 32
          %s554 = scalar_lea.vmem [#allocation5], %s553
          %555 = dma.done %s551, 512
        $region48: #{tpu_custom_call.1} parent=43 // pred_fallthru
          _
      $region44: #{tpu_custom_call.1} parent=5 // pred_fallthru
        _
    $region6: #{tpu_custom_call.1} parent=1 // loop_footer
      %s17 = sadd.s32 1, %s13
    $region7: #{tpu_custom_call.1} parent=1 // loop_footer_branch
      %12 = sbr.rel target = $region3
    $region8: #{tpu_custom_call.1} parent=1 // loop_exit
      _
    %556 = vsyncpa [#allocation3], 1
    %s557 = scalar_lea.sflag [#allocation3], 1
    %558 = vsyncpa %s557, 1
    %559 = vsyncpa [#allocation4], 1
    %s560 = scalar_lea.sflag [#allocation4], 1
    %561 = vsyncpa %s560, 1

</llo_original>
